<compile_context>
chip_gen: v5e
topology: v5e:2x2
jax: 0.10.0
libtpu: 0.0.40
codegen_flags: <defaults>
</compile_context>

<pallas_src>
import jax
import jax.numpy as jnp
import numpy as np
from jax import lax
from jax.experimental import pallas as pl
from jax.experimental.pallas import tpu as pltpu

# ---------------- configuration (small, deterministic) ----------------
N = 2                         # batch
HEADS = 4                     # acts as the sequence length inside attention
HEAD_DIM = 8
EMBED = HEADS * HEAD_DIM      # 32
PROJ_D = 6                    # fixed in the reference SelfAttention
FWD_EXP = 2
HIDDEN = FWD_EXP * EMBED      # 64
NH = N * HEADS                # 8  (rows of the stacked attention block)
LN_EPS = 1e-5
SCALE = float(EMBED) ** 0.5

# ---- slab A layout (lane width = EMBED = 32); all blocks 8-row aligned ----
R_X2 = 0                      # (NH, D)  x, head-major rows r = h*N + n
R_XF = 8                      # (N, E)   x, flattened per sample
R_POS2 = 16                   # (NH, D)  pos tiled to head-major rows
R_WQK = 24                    # (D, D)   Wq^T @ Wk / sqrt(E)
R_MASK = 32                   # (NH, NH) additive block-diagonal mask (0 / -1e30)
R_WFC = 40                    # (E, E)   fc_out weight, transposed
R_VEC = 72                    # 7 single rows: pos_f, bfc, n1w, n1b, b2, n2w, n2b
ROWS_A = 80
V_POSF, V_BFC, V_N1W, V_N1B, V_B2, V_N2W, V_N2B = range(7)

# ---- slab B layout (lane width = HIDDEN = 64) ----
R_W1 = 0                      # (E, HID)  W1^T
R_W2 = EMBED                  # (E, HID)  torch W2 (E, HID)
R_B1 = 2 * EMBED              # (1, HID)  b1
ROWS_B = 72

# block-diagonal additive mask, head-major rows: sample id = r % N
_r = np.arange(NH)
MASK_BIAS = np.where((_r[:, None] % N) == (_r[None, :] % N),
                     0.0, -1e30).astype(np.float32)


def _layer_norm(v, w, b):
    # v: (N, E), w/b: (1, E).  Biased variance, eps=1e-5 (torch.nn.LayerNorm).
    mu = jnp.mean(v, axis=-1, keepdims=True)
    c = v - mu
    var = jnp.mean(c * c, axis=-1, keepdims=True)
    return c * lax.rsqrt(var + LN_EPS) * w + b


def encoder_kernel(a_ref, b_ref, out_ref):
    # a_ref: (ROWS_A, EMBED)   packed data + narrow params
    # b_ref: (ROWS_B, HIDDEN)  packed feed-forward weights
    # out_ref: (N, EMBED)
    def vec(i):
        return a_ref[R_VEC + i:R_VEC + i + 1, :]

    # ---- positional embedding add (both layouts, whole batch) ----
    h2 = a_ref[R_X2:R_X2 + NH, 0:HEAD_DIM] + a_ref[R_POS2:R_POS2 + NH, 0:HEAD_DIM]
    h_flat = a_ref[R_XF:R_XF + N, :] + vec(V_POSF)                    # (N, E)

    # ---- self-attention for the whole batch (block-diagonal mask) ----
    wqk = a_ref[R_WQK:R_WQK + HEAD_DIM, 0:HEAD_DIM]                   # (D, D)
    t = jnp.dot(h2, wqk, preferred_element_type=jnp.float32)          # (NH, D)
    energy = lax.dot_general(t, h2, (((1,), (1,)), ((), ())),
                             preferred_element_type=jnp.float32)      # (NH, NH)
    energy = energy + a_ref[R_MASK:R_MASK + NH, 0:NH]                 # mask bias

    m = jnp.max(energy, axis=-1, keepdims=True)
    e = jnp.exp(energy - m)
    attn = e * pl.reciprocal(jnp.sum(e, axis=-1, keepdims=True), approx=False)
    av = jnp.dot(attn, h2, preferred_element_type=jnp.float32)        # (NH, D)

    # ---- fc_out:  av_flat @ Wfc^T + bfc, as a sum over heads ----
    # (avoids the (H,D)->(1,E) sublane->lane concatenate; av rows for head h
    #  across the whole batch are the contiguous block av[h*N:(h+1)*N]).
    attn_out = vec(V_BFC)
    for h in range(HEADS):
        av_h = av[h * N:(h + 1) * N, :]                                # (N, D)
        wfc_h = a_ref[R_WFC + h * HEAD_DIM:R_WFC + (h + 1) * HEAD_DIM, :]  # (D, E)
        attn_out = attn_out + jnp.dot(av_h, wfc_h,
                                      preferred_element_type=jnp.float32)

    # ---- TransformerBlock (whole-batch matmuls) ----
    x1 = _layer_norm(attn_out + h_flat, vec(V_N1W), vec(V_N1B))       # (N, E)

    w1 = b_ref[R_W1:R_W1 + EMBED, :]                                  # (E, HIDDEN)
    w2 = b_ref[R_W2:R_W2 + EMBED, :]                                  # (E, HIDDEN) torch layout
    b1 = b_ref[R_B1:R_B1 + 1, :]                                      # (1, HIDDEN)
    ff = jnp.maximum(jnp.dot(x1, w1, preferred_element_type=jnp.float32) + b1, 0.0)
    ff2 = lax.dot_general(ff, w2, (((1,), (1,)), ((), ())),
                          preferred_element_type=jnp.float32) + vec(V_B2)

    out_ref[...] = _layer_norm(ff2 + x1, vec(V_N2W), vec(V_N2B))


def make_params(key):
    ks = jax.random.split(key, 12)
    p = {}
    p["pos"] = jax.random.normal(ks[0], (HEADS, HEAD_DIM), jnp.float32)
    p["wk"] = jax.random.normal(ks[1], (PROJ_D, HEAD_DIM), jnp.float32) * 0.2
    p["wq"] = jax.random.normal(ks[2], (PROJ_D, HEAD_DIM), jnp.float32) * 0.2
    p["wfc"] = jax.random.normal(ks[3], (EMBED, EMBED), jnp.float32) * 0.1
    p["bfc"] = jax.random.normal(ks[4], (EMBED,), jnp.float32) * 0.1
    p["n1w"] = jnp.ones((EMBED,), jnp.float32) + 0.05 * jax.random.normal(ks[5], (EMBED,))
    p["n1b"] = 0.05 * jax.random.normal(ks[6], (EMBED,))
    p["w1"] = jax.random.normal(ks[7], (HIDDEN, EMBED), jnp.float32) * 0.1
    p["b1"] = jax.random.normal(ks[8], (HIDDEN,), jnp.float32) * 0.1
    p["w2"] = jax.random.normal(ks[9], (EMBED, HIDDEN), jnp.float32) * 0.1
    p["b2"] = jax.random.normal(ks[10], (EMBED,), jnp.float32) * 0.1
    p["n2w"] = jnp.ones((EMBED,), jnp.float32) + 0.05 * jax.random.normal(ks[11], (EMBED,))
    p["n2b"] = jnp.zeros((EMBED,), jnp.float32)
    return p


@jax.jit
def encoder_pallas(x, params):
    # x: (N, 1, HEADS, HEAD_DIM)  -> squeeze steps dim (matches torch.squeeze(x, 1))
    x3 = jnp.squeeze(x, axis=1).astype(jnp.float32)                 # (N, H, D)

    # -- data, in the two layouts the kernel consumes --
    x2 = jnp.transpose(x3, (1, 0, 2)).reshape(NH, HEAD_DIM)         # head-major (NH, D)
    x_flat = x3.reshape(N, EMBED)                                   # (N, E)

    pos = params["pos"].astype(jnp.float32)                         # (H, D)
    pos2 = jnp.repeat(pos, N, axis=0)                               # (NH, D), row h*N+n = pos[h]
    wqk = (params["wq"].T @ params["wk"]) * (1.0 / SCALE)           # (D, D), scale folded in

    # -- packed slabs: 2 input DMAs total --
    slab_a = jnp.zeros((ROWS_A, EMBED), jnp.float32)
    slab_a = slab_a.at[R_X2:R_X2 + NH, 0:HEAD_DIM].set(x2)
    slab_a = slab_a.at[R_XF:R_XF + N, :].set(x_flat)
    slab_a = slab_a.at[R_POS2:R_POS2 + NH, 0:HEAD_DIM].set(pos2)
    slab_a = slab_a.at[R_WQK:R_WQK + HEAD_DIM, 0:HEAD_DIM].set(wqk)
    slab_a = slab_a.at[R_MASK:R_MASK + NH, 0:NH].set(jnp.asarray(MASK_BIAS))
    slab_a = slab_a.at[R_WFC:R_WFC + EMBED, :].set(params["wfc"].T)
    vec_rows = jnp.stack([
        pos.reshape(EMBED),                 # pos, flattened per sample
        params["bfc"].astype(jnp.float32),
        params["n1w"].astype(jnp.float32),
        params["n1b"].astype(jnp.float32),
        params["b2"].astype(jnp.float32),
        params["n2w"].astype(jnp.float32),
        params["n2b"].astype(jnp.float32),
    ], axis=0)                                                      # (7, EMBED)
    slab_a = slab_a.at[R_VEC:R_VEC + 7, :].set(vec_rows)

    slab_b = jnp.zeros((ROWS_B, HIDDEN), jnp.float32)
    slab_b = slab_b.at[R_W1:R_W1 + EMBED, :].set(params["w1"].T)    # W1^T  (E, HID)
    slab_b = slab_b.at[R_W2:R_W2 + EMBED, :].set(params["w2"])      # torch W2 (E, HID)
    slab_b = slab_b.at[R_B1:R_B1 + 1, :].set(params["b1"][None, :].astype(jnp.float32))

    return pl.pallas_call(
        encoder_kernel,
        out_shape=jax.ShapeDtypeStruct((N, EMBED), jnp.float32),
        in_specs=[pl.BlockSpec(memory_space=pltpu.MemorySpace.VMEM),
                  pl.BlockSpec(memory_space=pltpu.MemorySpace.VMEM)],
        out_specs=pl.BlockSpec(memory_space=pltpu.MemorySpace.VMEM),
    )(slab_a, slab_b)


def encoder_reference(x, params):
    """Pure-JAX mirror of the PyTorch forward, for verification."""
    x3 = jnp.squeeze(x, axis=1)
    h = x3 + params["pos"][None]                                    # (N, H, D)
    k = jnp.einsum("nhd,pd->nhp", h, params["wk"])
    q = jnp.einsum("nhd,pd->nhp", h, params["wq"])
    energy = jnp.einsum("nqd,nkd->nqk", q, k) / SCALE
    attn = jax.nn.softmax(energy, axis=2)
    av = jnp.einsum("nqk,nkh->nqh", attn, h).reshape(N, EMBED)
    attn_out = av @ params["wfc"].T + params["bfc"]
    h_flat = h.reshape(N, EMBED)

    def ln(v, w, b):
        mu = jnp.mean(v, -1, keepdims=True)
        var = jnp.mean((v - mu) ** 2, -1, keepdims=True)
        return (v - mu) / jnp.sqrt(var + LN_EPS) * w + b

    x1 = ln(attn_out + h_flat, params["n1w"], params["n1b"])
    ff = jax.nn.relu(x1 @ params["w1"].T + params["b1"]) @ params["w2"].T + params["b2"]
    return ln(ff + x1, params["n2w"], params["n2b"])


if __name__ == "__main__":
    key = jax.random.PRNGKey(0)
    kx, kp = jax.random.split(key)
    x = jax.random.normal(kx, (N, 1, HEADS, HEAD_DIM), jnp.float32)
    params = make_params(kp)

    out = encoder_pallas(x, params)
    out = jax.block_until_ready(out)

    ref = encoder_reference(x, params)
    np.testing.assert_allclose(np.asarray(out), np.asarray(ref), rtol=1e-4, atol=1e-4)

    print("KERNEL_OK")
</pallas_src>

<mosaic_0001>
module attributes {stable_mosaic.version = 11 : i64} {
  func.func @encoder_kernel(%arg0: memref<80x32xf32, #tpu.memory_space<vmem>>, %arg1: memref<72x64xf32, #tpu.memory_space<vmem>>, %arg2: memref<2x32xf32, #tpu.memory_space<vmem>>) attributes {dimension_semantics = [], scalar_prefetch = 0 : i64, scratch_operands = 0 : i64, tpu.core_type = #tpu.core_type<tc>} {
    %c0 = arith.constant 0 : index
    %c0_0 = arith.constant 0 : index
    %0 = vector.load %arg0[%c0, %c0_0] : memref<80x32xf32, #tpu.memory_space<vmem>>, vector<8x8xf32>
    %c16 = arith.constant 16 : index
    %c0_1 = arith.constant 0 : index
    %1 = vector.load %arg0[%c16, %c0_1] : memref<80x32xf32, #tpu.memory_space<vmem>>, vector<8x8xf32>
    %2 = arith.addf %0, %1 : vector<8x8xf32>
    %c8 = arith.constant 8 : index
    %c0_2 = arith.constant 0 : index
    %3 = vector.load %arg0[%c8, %c0_2] : memref<80x32xf32, #tpu.memory_space<vmem>>, vector<2x32xf32>
    %c72 = arith.constant 72 : index
    %c0_3 = arith.constant 0 : index
    %4 = vector.load %arg0[%c72, %c0_3] : memref<80x32xf32, #tpu.memory_space<vmem>>, vector<1x32xf32>
    %5 = vector.broadcast %4 : vector<1x32xf32> to vector<2x32xf32>
    %6 = arith.addf %3, %5 : vector<2x32xf32>
    %c24 = arith.constant 24 : index
    %c0_4 = arith.constant 0 : index
    %7 = vector.load %arg0[%c24, %c0_4] : memref<80x32xf32, #tpu.memory_space<vmem>>, vector<8x8xf32>
    %cst = arith.constant dense<0.000000e+00> : vector<8x8xf32>
    %8 = tpu.matmul %2, %7, %cst {dimension_numbers = #tpu.dot_dimension_numbers<[1], [0], [0], [1], [0, 0, 1, 1], [], []>} : vector<8x8xf32>, vector<8x8xf32>, vector<8x8xf32> -> vector<8x8xf32>
    %cst_5 = arith.constant dense<0.000000e+00> : vector<8x8xf32>
    %9 = tpu.matmul %8, %2, %cst_5 {dimension_numbers = #tpu.dot_dimension_numbers<[1], [1], [0], [0], [0, 0, 1, 0], [], []>} : vector<8x8xf32>, vector<8x8xf32>, vector<8x8xf32> -> vector<8x8xf32>
    %c32 = arith.constant 32 : index
    %c0_6 = arith.constant 0 : index
    %10 = vector.load %arg0[%c32, %c0_6] : memref<80x32xf32, #tpu.memory_space<vmem>>, vector<8x8xf32>
    %11 = arith.addf %9, %10 : vector<8x8xf32>
    %cst_7 = arith.constant dense<0xFF800000> : vector<8xf32>
    %12 = vector.multi_reduction <maximumf>, %11, %cst_7 [1] : vector<8x8xf32> to vector<8xf32>
    %13 = vector.shape_cast %12 : vector<8xf32> to vector<8x1xf32>
    %14 = vector.broadcast %13 : vector<8x1xf32> to vector<8x8xf32>
    %15 = arith.subf %11, %14 : vector<8x8xf32>
    %16 = math.exp %15 : vector<8x8xf32>
    %cst_8 = arith.constant dense<0.000000e+00> : vector<8xf32>
    %17 = vector.multi_reduction <add>, %16, %cst_8 [1] : vector<8x8xf32> to vector<8xf32>
    %18 = vector.shape_cast %17 : vector<8xf32> to vector<8x1xf32>
    %19 = tpu.reciprocal %18 : vector<8x1xf32> -> vector<8x1xf32>
    %20 = vector.broadcast %19 : vector<8x1xf32> to vector<8x8xf32>
    %21 = arith.mulf %16, %20 : vector<8x8xf32>
    %cst_9 = arith.constant dense<0.000000e+00> : vector<8x8xf32>
    %22 = tpu.matmul %21, %2, %cst_9 {dimension_numbers = #tpu.dot_dimension_numbers<[1], [0], [0], [1], [0, 0, 1, 1], [], []>} : vector<8x8xf32>, vector<8x8xf32>, vector<8x8xf32> -> vector<8x8xf32>
    %c73 = arith.constant 73 : index
    %c0_10 = arith.constant 0 : index
    %23 = vector.load %arg0[%c73, %c0_10] : memref<80x32xf32, #tpu.memory_space<vmem>>, vector<1x32xf32>
    %24 = vector.extract_strided_slice %22 {offsets = [0, 0], sizes = [2, 8], strides = [1, 1]} : vector<8x8xf32> to vector<2x8xf32>
    %c40 = arith.constant 40 : index
    %c0_11 = arith.constant 0 : index
    %25 = vector.load %arg0[%c40, %c0_11] : memref<80x32xf32, #tpu.memory_space<vmem>>, vector<8x32xf32>
    %cst_12 = arith.constant dense<0.000000e+00> : vector<2x32xf32>
    %26 = tpu.matmul %24, %25, %cst_12 {dimension_numbers = #tpu.dot_dimension_numbers<[1], [0], [0], [1], [0, 0, 1, 1], [], []>} : vector<2x8xf32>, vector<8x32xf32>, vector<2x32xf32> -> vector<2x32xf32>
    %27 = vector.broadcast %23 : vector<1x32xf32> to vector<2x32xf32>
    %28 = arith.addf %27, %26 : vector<2x32xf32>
    %29 = vector.extract_strided_slice %22 {offsets = [2, 0], sizes = [2, 8], strides = [1, 1]} : vector<8x8xf32> to vector<2x8xf32>
    %c48 = arith.constant 48 : index
    %c0_13 = arith.constant 0 : index
    %30 = vector.load %arg0[%c48, %c0_13] : memref<80x32xf32, #tpu.memory_space<vmem>>, vector<8x32xf32>
    %cst_14 = arith.constant dense<0.000000e+00> : vector<2x32xf32>
    %31 = tpu.matmul %29, %30, %cst_14 {dimension_numbers = #tpu.dot_dimension_numbers<[1], [0], [0], [1], [0, 0, 1, 1], [], []>} : vector<2x8xf32>, vector<8x32xf32>, vector<2x32xf32> -> vector<2x32xf32>
    %32 = arith.addf %28, %31 : vector<2x32xf32>
    %33 = vector.extract_strided_slice %22 {offsets = [4, 0], sizes = [2, 8], strides = [1, 1]} : vector<8x8xf32> to vector<2x8xf32>
    %c56 = arith.constant 56 : index
    %c0_15 = arith.constant 0 : index
    %34 = vector.load %arg0[%c56, %c0_15] : memref<80x32xf32, #tpu.memory_space<vmem>>, vector<8x32xf32>
    %cst_16 = arith.constant dense<0.000000e+00> : vector<2x32xf32>
    %35 = tpu.matmul %33, %34, %cst_16 {dimension_numbers = #tpu.dot_dimension_numbers<[1], [0], [0], [1], [0, 0, 1, 1], [], []>} : vector<2x8xf32>, vector<8x32xf32>, vector<2x32xf32> -> vector<2x32xf32>
    %36 = arith.addf %32, %35 : vector<2x32xf32>
    %37 = vector.extract_strided_slice %22 {offsets = [6, 0], sizes = [2, 8], strides = [1, 1]} : vector<8x8xf32> to vector<2x8xf32>
    %c64 = arith.constant 64 : index
    %c0_17 = arith.constant 0 : index
    %38 = vector.load %arg0[%c64, %c0_17] : memref<80x32xf32, #tpu.memory_space<vmem>>, vector<8x32xf32>
    %cst_18 = arith.constant dense<0.000000e+00> : vector<2x32xf32>
    %39 = tpu.matmul %37, %38, %cst_18 {dimension_numbers = #tpu.dot_dimension_numbers<[1], [0], [0], [1], [0, 0, 1, 1], [], []>} : vector<2x8xf32>, vector<8x32xf32>, vector<2x32xf32> -> vector<2x32xf32>
    %40 = arith.addf %36, %39 : vector<2x32xf32>
    %41 = arith.addf %40, %6 : vector<2x32xf32>
    %c74 = arith.constant 74 : index
    %c0_19 = arith.constant 0 : index
    %42 = vector.load %arg0[%c74, %c0_19] : memref<80x32xf32, #tpu.memory_space<vmem>>, vector<1x32xf32>
    %c75 = arith.constant 75 : index
    %c0_20 = arith.constant 0 : index
    %43 = vector.load %arg0[%c75, %c0_20] : memref<80x32xf32, #tpu.memory_space<vmem>>, vector<1x32xf32>
    %cst_21 = arith.constant dense<0.000000e+00> : vector<2xf32>
    %44 = vector.multi_reduction <add>, %41, %cst_21 [1] : vector<2x32xf32> to vector<2xf32>
    %45 = vector.shape_cast %44 : vector<2xf32> to vector<2x1xf32>
    %cst_22 = arith.constant 3.200000e+01 : f32
    %46 = vector.broadcast %cst_22 : f32 to vector<2x1xf32>
    %47 = arith.divf %45, %46 : vector<2x1xf32>
    %48 = vector.broadcast %47 : vector<2x1xf32> to vector<2x32xf32>
    %49 = arith.subf %41, %48 : vector<2x32xf32>
    %50 = arith.mulf %49, %49 : vector<2x32xf32>
    %cst_23 = arith.constant dense<0.000000e+00> : vector<2xf32>
    %51 = vector.multi_reduction <add>, %50, %cst_23 [1] : vector<2x32xf32> to vector<2xf32>
    %52 = vector.shape_cast %51 : vector<2xf32> to vector<2x1xf32>
    %cst_24 = arith.constant 3.200000e+01 : f32
    %53 = vector.broadcast %cst_24 : f32 to vector<2x1xf32>
    %54 = arith.divf %52, %53 : vector<2x1xf32>
    %cst_25 = arith.constant 9.99999974E-6 : f32
    %55 = vector.broadcast %cst_25 : f32 to vector<2x1xf32>
    %56 = arith.addf %54, %55 : vector<2x1xf32>
    %57 = math.rsqrt %56 : vector<2x1xf32>
    %58 = vector.broadcast %57 : vector<2x1xf32> to vector<2x32xf32>
    %59 = arith.mulf %49, %58 : vector<2x32xf32>
    %60 = vector.broadcast %42 : vector<1x32xf32> to vector<2x32xf32>
    %61 = arith.mulf %59, %60 : vector<2x32xf32>
    %62 = vector.broadcast %43 : vector<1x32xf32> to vector<2x32xf32>
    %63 = arith.addf %61, %62 : vector<2x32xf32>
    %c0_26 = arith.constant 0 : index
    %c0_27 = arith.constant 0 : index
    %64 = vector.load %arg1[%c0_26, %c0_27] : memref<72x64xf32, #tpu.memory_space<vmem>>, vector<32x64xf32>
    %c32_28 = arith.constant 32 : index
    %c0_29 = arith.constant 0 : index
    %65 = vector.load %arg1[%c32_28, %c0_29] : memref<72x64xf32, #tpu.memory_space<vmem>>, vector<32x64xf32>
    %c64_30 = arith.constant 64 : index
    %c0_31 = arith.constant 0 : index
    %66 = vector.load %arg1[%c64_30, %c0_31] : memref<72x64xf32, #tpu.memory_space<vmem>>, vector<1x64xf32>
    %cst_32 = arith.constant dense<0.000000e+00> : vector<2x64xf32>
    %67 = tpu.matmul %63, %64, %cst_32 {dimension_numbers = #tpu.dot_dimension_numbers<[1], [0], [0], [1], [0, 0, 1, 1], [], []>} : vector<2x32xf32>, vector<32x64xf32>, vector<2x64xf32> -> vector<2x64xf32>
    %68 = vector.broadcast %66 : vector<1x64xf32> to vector<2x64xf32>
    %69 = arith.addf %67, %68 : vector<2x64xf32>
    %cst_33 = arith.constant 0.000000e+00 : f32
    %70 = vector.broadcast %cst_33 : f32 to vector<2x64xf32>
    %71 = arith.maximumf %69, %70 : vector<2x64xf32>
    %cst_34 = arith.constant dense<0.000000e+00> : vector<2x32xf32>
    %72 = tpu.matmul %71, %65, %cst_34 {dimension_numbers = #tpu.dot_dimension_numbers<[1], [1], [0], [0], [0, 0, 1, 0], [], []>} : vector<2x64xf32>, vector<32x64xf32>, vector<2x32xf32> -> vector<2x32xf32>
    %c76 = arith.constant 76 : index
    %c0_35 = arith.constant 0 : index
    %73 = vector.load %arg0[%c76, %c0_35] : memref<80x32xf32, #tpu.memory_space<vmem>>, vector<1x32xf32>
    %74 = vector.broadcast %73 : vector<1x32xf32> to vector<2x32xf32>
    %75 = arith.addf %72, %74 : vector<2x32xf32>
    %76 = arith.addf %75, %63 : vector<2x32xf32>
    %c77 = arith.constant 77 : index
    %c0_36 = arith.constant 0 : index
    %77 = vector.load %arg0[%c77, %c0_36] : memref<80x32xf32, #tpu.memory_space<vmem>>, vector<1x32xf32>
    %c78 = arith.constant 78 : index
    %c0_37 = arith.constant 0 : index
    %78 = vector.load %arg0[%c78, %c0_37] : memref<80x32xf32, #tpu.memory_space<vmem>>, vector<1x32xf32>
    %cst_38 = arith.constant dense<0.000000e+00> : vector<2xf32>
    %79 = vector.multi_reduction <add>, %76, %cst_38 [1] : vector<2x32xf32> to vector<2xf32>
    %80 = vector.shape_cast %79 : vector<2xf32> to vector<2x1xf32>
    %cst_39 = arith.constant 3.200000e+01 : f32
    %81 = vector.broadcast %cst_39 : f32 to vector<2x1xf32>
    %82 = arith.divf %80, %81 : vector<2x1xf32>
    %83 = vector.broadcast %82 : vector<2x1xf32> to vector<2x32xf32>
    %84 = arith.subf %76, %83 : vector<2x32xf32>
    %85 = arith.mulf %84, %84 : vector<2x32xf32>
    %cst_40 = arith.constant dense<0.000000e+00> : vector<2xf32>
    %86 = vector.multi_reduction <add>, %85, %cst_40 [1] : vector<2x32xf32> to vector<2xf32>
    %87 = vector.shape_cast %86 : vector<2xf32> to vector<2x1xf32>
    %cst_41 = arith.constant 3.200000e+01 : f32
    %88 = vector.broadcast %cst_41 : f32 to vector<2x1xf32>
    %89 = arith.divf %87, %88 : vector<2x1xf32>
    %cst_42 = arith.constant 9.99999974E-6 : f32
    %90 = vector.broadcast %cst_42 : f32 to vector<2x1xf32>
    %91 = arith.addf %89, %90 : vector<2x1xf32>
    %92 = math.rsqrt %91 : vector<2x1xf32>
    %93 = vector.broadcast %92 : vector<2x1xf32> to vector<2x32xf32>
    %94 = arith.mulf %84, %93 : vector<2x32xf32>
    %95 = vector.broadcast %77 : vector<1x32xf32> to vector<2x32xf32>
    %96 = arith.mulf %94, %95 : vector<2x32xf32>
    %97 = vector.broadcast %78 : vector<1x32xf32> to vector<2x32xf32>
    %98 = arith.addf %96, %97 : vector<2x32xf32>
    %c0_43 = arith.constant 0 : index
    %c0_44 = arith.constant 0 : index
    %99 = vector.load %arg2[%c0_43, %c0_44] : memref<2x32xf32, #tpu.memory_space<vmem>>, vector<2x32xf32>
    tpu.vector_store %arg2[%c0_43, %c0_44], %98 {strides = array<i32>} : memref<2x32xf32, #tpu.memory_space<vmem>>, vector<2x32xf32>,
    return
  }
}

</mosaic_0001>

<llo_original>
// kernel: encoder_pallas.1
$region0: #{encoder_pallas.1}
  #allocation0 [shape = 'u32[]', space=smem, size = 0x4, offset = 0x4, fixed_abs, tag = 'smem constant byte address 0x4 - core index']
  #allocation1 [shape = 'u32[72,128]{1,0:T(1,128)}', space=vmem, size = 0x9000, scoped, tag = 'internal scratch']
  %s0 = inlined_call_operand.vmem [shape: f32[80,32], index: 0, kind: input, shape index: {}]
  %s1 = inlined_call_operand.vmem [shape: f32[72,64], index: 1, kind: input, shape index: {}]
  %s2 = inlined_call_operand.hbm [shape: f32[2,32], index: 2, kind: output, shape index: {}]
  %s3 = sld [smem:[#allocation0]]
  $region18: #{encoder_pallas.1} parent=0
    _
  %s5 = ssub.s32 1, %s3
  %s6 = scalar_select 0, %s5, %s3
  $region1: #{encoder_pallas.1} parent=0
    #allocation2 [shape = 'u8[1024]{0}', space=vmem, size = 0x400, scoped, tag = 'output window, operand 0, single buffered']
    #allocation3 [shape = 's32[1]{0}', space=sflag, size = 0x4, scoped, tag = 'scoped memory for encoder_pallas.1']
    %7 = vsyncpa [#allocation3], 0
    // Predicated region
    $region2: #{encoder_pallas.1} parent=1 // pred_check
      _
    $region3: #{encoder_pallas.1} parent=1 // pred_check_branch
      %9 = sbr.rel (0) target = $region5
    $region4: #{encoder_pallas.1} parent=1 // pred_region
      _
    $region5: #{encoder_pallas.1} parent=1 // pred_fallthru
      _
    // Predicated region
    $region6: #{encoder_pallas.1} parent=1 // pred_check
      _
    $region7: #{encoder_pallas.1} parent=1 // pred_check_branch
      %11 = sbr.rel (0) target = $region9
    $region8: #{encoder_pallas.1} parent=1 // pred_region
      _
    $region9: #{encoder_pallas.1} parent=1 // pred_fallthru
      _
    %v12 = vld [vmem:[%s0] sm:$0xff]
    %v13 = vld [vmem:[%s0 + $0x10] sm:$0xff]
    %v14 = vadd.f32 %v12, %v13
    %v15 = vld [vmem:[%s0 + $0x8] sm:$0x3]
    %v16 = vld [vmem:[%s0 + $0x48] sm:$0x1]
    %v17 = vperm.slane %v16, 0
    %v18 = vadd.f32 %v15, %v17
    %v19 = vld [vmem:[%s0 + $0x18] sm:$0xff]
    %vm20 = vcmask 64512
    %v22 = vsel %vm20, %v14, 0
    %24 = vmatpush.msra.mxu0 0.0
    %25 = vmatpush.msra.mxu0 0.0
    %26 = vmatpush.msra.mxu0 0.0
    %27 = vmatpush.msra.mxu0 0.0
    %28 = vmatpush.msra.mxu0 0.0
    %29 = vmatpush.msra.mxu0 0.0
    %30 = vmatpush.msra.mxu0 0.0
    %31 = vmatpush.msra.mxu0 0.0
    %32 = vmatpush.msra.mxu0 0.0
    %33 = vmatpush.msra.mxu0 0.0
    %34 = vmatpush.msra.mxu0 0.0
    %35 = vmatpush.msra.mxu0 0.0
    %36 = vmatpush.msra.mxu0 0.0
    %37 = vmatpush.msra.mxu0 0.0
    %38 = vmatpush.msra.mxu0 0.0
    %39 = vmatpush.msra.mxu0 %v19
    %40 = vmatmul.f32.gmra.mxu0 %v22
    %v41 = vpop.f32.mrf.mxu0
    %v42 = vadd.f32 0.0, %v41
    %43 = vdwg.mxu0
    %v44 = vld [vmem:[%s0 + $0x20] sm:$0xff]
    %v46 = vsel %vm20, %v42, 0
    %48 = vmatpush.xpose.msra.mxu0 0.0
    %49 = vmatpush.xpose.msra.mxu0 0.0
    %50 = vmatpush.xpose.msra.mxu0 0.0
    %51 = vmatpush.xpose.msra.mxu0 0.0
    %52 = vmatpush.xpose.msra.mxu0 0.0
    %53 = vmatpush.xpose.msra.mxu0 0.0
    %54 = vmatpush.xpose.msra.mxu0 0.0
    %55 = vmatpush.xpose.msra.mxu0 0.0
    %56 = vmatpush.xpose.msra.mxu0 0.0
    %57 = vmatpush.xpose.msra.mxu0 0.0
    %58 = vmatpush.xpose.msra.mxu0 0.0
    %59 = vmatpush.xpose.msra.mxu0 0.0
    %60 = vmatpush.xpose.msra.mxu0 0.0
    %61 = vmatpush.xpose.msra.mxu0 0.0
    %62 = vmatpush.xpose.msra.mxu0 0.0
    %63 = vmatpush.xpose.msra.mxu0 %v22
    %64 = vmatmul.f32.gmra.mxu0 %v46
    %v65 = vpop.f32.mrf.mxu0
    %v66 = vadd.f32 %v44, %v65
    %67 = vdwg.mxu0
    %v68 = vsel %vm20, %v66, -inf
    %69 = vmax.xlane.f32.xlu0 %v68
    %v70 = vpop.xlane.xlu0 %69
    %v71 = vsub.f32 %v66, %v70
    %v72 = vmul.f32 %v71, 1.442695
    %v73 = vpow.pop %v72
    %v74 = vsel %vm20, %v73, 0.0
    %75 = vadd.xlane.f32.xlu0 %v74
    %v76 = vpop.xlane.xlu0 %75
    %v77 = vrcp.pop %v76
    %v78 = vmul.f32 %v76, %v77
    %v79 = vsub.f32 1.0, %v78
    %v80 = vmul.f32 %v77, %v79
    %v81 = vadd.f32 %v77, %v80
    %vm82 = vweird.f32 %v76
    %vm83 = vweird.f32 %v77
    %vm84 = vmor %vm82, %vm83
    %v85 = vsel %vm84, %v77, %v81
    %v86 = vand.u32 2147483647, %v76
    %vm87 = vcmp.eq.f32.partialorder %v86, 8.507059e+37
    %v88 = vand.u32 %v76, 2147483648
    %v89 = vor.u32 1.1754944e-38, %v88
    %v90 = vsel %vm87, %v89, %v85
    %v91 = vmul.f32 %v73, %v90
    %v93 = vsel %vm20, %v91, 0
    %95 = vmatpush.msra.mxu0 0.0
    %96 = vmatpush.msra.mxu0 0.0
    %97 = vmatpush.msra.mxu0 0.0
    %98 = vmatpush.msra.mxu0 0.0
    %99 = vmatpush.msra.mxu0 0.0
    %100 = vmatpush.msra.mxu0 0.0
    %101 = vmatpush.msra.mxu0 0.0
    %102 = vmatpush.msra.mxu0 0.0
    %103 = vmatpush.msra.mxu0 0.0
    %104 = vmatpush.msra.mxu0 0.0
    %105 = vmatpush.msra.mxu0 0.0
    %106 = vmatpush.msra.mxu0 0.0
    %107 = vmatpush.msra.mxu0 0.0
    %108 = vmatpush.msra.mxu0 0.0
    %109 = vmatpush.msra.mxu0 0.0
    %110 = vmatpush.msra.mxu0 %v14
    %111 = vmatmul.f32.gmra.mxu0 %v93
    %v112 = vpop.f32.mrf.mxu0
    %v113 = vadd.f32 0.0, %v112
    %114 = vdwg.mxu0
    %v115 = vld [vmem:[%s0 + $0x49] sm:$0x1]
    %v116 = vld [vmem:[%s0 + $0x28] sm:$0xff]
    %v118 = vsel %vm20, %v113, 0
    %120 = vmatpush.msra.mxu0 0.0
    %121 = vmatpush.msra.mxu0 0.0
    %122 = vmatpush.msra.mxu0 0.0
    %123 = vmatpush.msra.mxu0 0.0
    %124 = vmatpush.msra.mxu0 0.0
    %125 = vmatpush.msra.mxu0 0.0
    %126 = vmatpush.msra.mxu0 0.0
    %127 = vmatpush.msra.mxu0 0.0
    %128 = vmatpush.msra.mxu0 0.0
    %129 = vmatpush.msra.mxu0 0.0
    %130 = vmatpush.msra.mxu0 0.0
    %131 = vmatpush.msra.mxu0 0.0
    %132 = vmatpush.msra.mxu0 0.0
    %133 = vmatpush.msra.mxu0 0.0
    %134 = vmatpush.msra.mxu0 0.0
    %135 = vmatpush.msra.mxu0 %v116
    %136 = vmatmul.f32.gmra.mxu0 %v118
    %v137 = vpop.f32.mrf.mxu0
    %v138 = vadd.f32 0.0, %v137
    %139 = vdwg.mxu0
    %v140 = vperm.slane %v115, 0
    %v141 = vadd.f32 %v140, %v138
    %v142 = vld [vmem:[%s0 + $0x30] sm:$0xff]
    %v143 = vrot.slane %v113, 2
    %v144 = vsel %vm20, %v143, 0
    %146 = vmatpush.msra.mxu0 0.0
    %147 = vmatpush.msra.mxu0 0.0
    %148 = vmatpush.msra.mxu0 0.0
    %149 = vmatpush.msra.mxu0 0.0
    %150 = vmatpush.msra.mxu0 0.0
    %151 = vmatpush.msra.mxu0 0.0
    %152 = vmatpush.msra.mxu0 0.0
    %153 = vmatpush.msra.mxu0 0.0
    %154 = vmatpush.msra.mxu0 0.0
    %155 = vmatpush.msra.mxu0 0.0
    %156 = vmatpush.msra.mxu0 0.0
    %157 = vmatpush.msra.mxu0 0.0
    %158 = vmatpush.msra.mxu0 0.0
    %159 = vmatpush.msra.mxu0 0.0
    %160 = vmatpush.msra.mxu0 0.0
    %161 = vmatpush.msra.mxu0 %v142
    %162 = vmatmul.f32.gmra.mxu0 %v144
    %v163 = vpop.f32.mrf.mxu0
    %v164 = vadd.f32 0.0, %v163
    %165 = vdwg.mxu0
    %v166 = vadd.f32 %v141, %v164
    %v167 = vld [vmem:[%s0 + $0x38] sm:$0xff]
    %v168 = vrot.slane %v113, 4
    %v169 = vsel %vm20, %v168, 0
    %171 = vmatpush.msra.mxu0 0.0
    %172 = vmatpush.msra.mxu0 0.0
    %173 = vmatpush.msra.mxu0 0.0
    %174 = vmatpush.msra.mxu0 0.0
    %175 = vmatpush.msra.mxu0 0.0
    %176 = vmatpush.msra.mxu0 0.0
    %177 = vmatpush.msra.mxu0 0.0
    %178 = vmatpush.msra.mxu0 0.0
    %179 = vmatpush.msra.mxu0 0.0
    %180 = vmatpush.msra.mxu0 0.0
    %181 = vmatpush.msra.mxu0 0.0
    %182 = vmatpush.msra.mxu0 0.0
    %183 = vmatpush.msra.mxu0 0.0
    %184 = vmatpush.msra.mxu0 0.0
    %185 = vmatpush.msra.mxu0 0.0
    %186 = vmatpush.msra.mxu0 %v167
    %187 = vmatmul.f32.gmra.mxu0 %v169
    %v188 = vpop.f32.mrf.mxu0
    %v189 = vadd.f32 0.0, %v188
    %190 = vdwg.mxu0
    %v191 = vadd.f32 %v166, %v189
    %v192 = vld [vmem:[%s0 + $0x40] sm:$0xff]
    %v193 = vrot.slane %v113, 6
    %v194 = vsel %vm20, %v193, 0
    %196 = vmatpush.msra.mxu0 0.0
    %197 = vmatpush.msra.mxu0 0.0
    %198 = vmatpush.msra.mxu0 0.0
    %199 = vmatpush.msra.mxu0 0.0
    %200 = vmatpush.msra.mxu0 0.0
    %201 = vmatpush.msra.mxu0 0.0
    %202 = vmatpush.msra.mxu0 0.0
    %203 = vmatpush.msra.mxu0 0.0
    %204 = vmatpush.msra.mxu0 0.0
    %205 = vmatpush.msra.mxu0 0.0
    %206 = vmatpush.msra.mxu0 0.0
    %207 = vmatpush.msra.mxu0 0.0
    %208 = vmatpush.msra.mxu0 0.0
    %209 = vmatpush.msra.mxu0 0.0
    %210 = vmatpush.msra.mxu0 0.0
    %211 = vmatpush.msra.mxu0 %v192
    %212 = vmatmul.f32.gmra.mxu0 %v194
    %v213 = vpop.f32.mrf.mxu0
    %v214 = vadd.f32 0.0, %v213
    %215 = vdwg.mxu0
    %v216 = vadd.f32 %v191, %v214
    %v217 = vadd.f32 %v216, %v18
    %v218 = vld [vmem:[%s0 + $0x4a] sm:$0x1]
    %v219 = vld [vmem:[%s0 + $0x4b] sm:$0x1]
    %vm220 = vcmask 254976
    %v221 = vsel %vm220, %v217, 0.0
    %222 = vadd.xlane.f32.xlu0 %v221
    %v223 = vpop.xlane.xlu0 %222
    %v224 = vrcp.pop 32.0
    %v225 = vmul.f32 32.0, %v224
    %v226 = vsub.f32 1.0, %v225
    %v227 = vmul.f32 %v224, %v226
    %v228 = vadd.f32 %v224, %v227
    %vm229 = vweird.f32 %v224
    %v230 = vsel %vm229, %v224, %v228
    %v231 = vmul.f32 %v223, %v230
    %v232 = vsub.f32 %v217, %v231
    %v233 = vmul.f32 %v232, %v232
    %v234 = vsel %vm220, %v233, 0.0
    %235 = vadd.xlane.f32.xlu0 %v234
    %v236 = vpop.xlane.xlu0 %235
    %v237 = vmul.f32 %v236, %v230
    %v238 = vadd.f32 %v237, 1e-05
    %v239 = vrsqrt.pop %v238
    %v240 = vmul.f32 %v239, %v238
    %v241 = vmul.f32 %v240, %v239
    %v242 = vmul.f32 0.5, %v241
    %v243 = vsub.f32 1.5, %v242
    %v244 = vmul.f32 %v239, %v243
    %vm245 = vweird.f32 %v238
    %vm246 = vweird.f32 %v239
    %vm247 = vmor %vm245, %vm246
    %v248 = vsel %vm247, %v239, %v244
    %v249 = vmul.f32 %v232, %v248
    %v250 = vperm.slane %v218, 0
    %v251 = vmul.f32 %v249, %v250
    %v252 = vperm.slane %v219, 0
    %v253 = vadd.f32 %v251, %v252
    %v254 = vld [vmem:[%s1] sm:$0xff]
    %v255 = vld [vmem:[%s1 + $0x8] sm:$0xff]
    %v256 = vld [vmem:[%s1 + $0x10] sm:$0xff]
    %v257 = vld [vmem:[%s1 + $0x18] sm:$0xff]
    %v258 = vld [vmem:[%s1 + $0x20] sm:$0xff]
    %v259 = vld [vmem:[%s1 + $0x28] sm:$0xff]
    %v260 = vld [vmem:[%s1 + $0x30] sm:$0xff]
    %v261 = vld [vmem:[%s1 + $0x38] sm:$0xff]
    %v262 = vld [vmem:[%s1 + $0x40] sm:$0x1]
    %v263 = vperm.slane %v262, 0
    %vm264 = vcmask 261120
    %v266 = vsel %vm264, %v253, 0
    %268 = vmatpush.msra.mxu0 0.0
    %269 = vmatpush.msra.mxu0 0.0
    %270 = vmatpush.msra.mxu0 0.0
    %271 = vmatpush.msra.mxu0 0.0
    %272 = vmatpush.msra.mxu0 0.0
    %273 = vmatpush.msra.mxu0 0.0
    %274 = vmatpush.msra.mxu0 0.0
    %275 = vmatpush.msra.mxu0 0.0
    %276 = vmatpush.msra.mxu0 0.0
    %277 = vmatpush.msra.mxu0 0.0
    %278 = vmatpush.msra.mxu0 0.0
    %279 = vmatpush.msra.mxu0 0.0
    %280 = vmatpush.msra.mxu0 %v257
    %281 = vmatpush.msra.mxu0 %v256
    %282 = vmatpush.msra.mxu0 %v255
    %283 = vmatpush.msra.mxu0 %v254
    %284 = vmatmul.f32.gmra.mxu0 %v266
    %v285 = vpop.f32.mrf.mxu0
    %v286 = vadd.f32 %v263, %v285
    %287 = vdwg.mxu0
    %v288 = vmax.f32 %v286, 0.0
    %v289 = vld [vmem:[%s0 + $0x4c] sm:$0x1]
    %v290 = vperm.slane %v289, 0
    %vm291 = vcmask 523264
    %v293 = vsel %vm291, %v288, 0
    %v296 = vsel %vm291, %v258, 0
    %v299 = vsel %vm291, %v259, 0
    %v302 = vsel %vm291, %v260, 0
    %v305 = vsel %vm291, %v261, 0
    %307 = vmatpush.xpose.msra.mxu0 0.0
    %308 = vmatpush.xpose.msra.mxu0 0.0
    %309 = vmatpush.xpose.msra.mxu0 0.0
    %310 = vmatpush.xpose.msra.mxu0 0.0
    %311 = vmatpush.xpose.msra.mxu0 0.0
    %312 = vmatpush.xpose.msra.mxu0 0.0
    %313 = vmatpush.xpose.msra.mxu0 0.0
    %314 = vmatpush.xpose.msra.mxu0 0.0
    %315 = vmatpush.xpose.msra.mxu0 0.0
    %316 = vmatpush.xpose.msra.mxu0 0.0
    %317 = vmatpush.xpose.msra.mxu0 0.0
    %318 = vmatpush.xpose.msra.mxu0 0.0
    %319 = vmatpush.xpose.msra.mxu0 %v305
    %320 = vmatpush.xpose.msra.mxu0 %v302
    %321 = vmatpush.xpose.msra.mxu0 %v299
    %322 = vmatpush.xpose.msra.mxu0 %v296
    %323 = vmatmul.f32.gmra.mxu0 %v293
    %v324 = vpop.f32.mrf.mxu0
    %v325 = vadd.f32 %v290, %v324
    %326 = vdwg.mxu0
    %v327 = vadd.f32 %v325, %v253
    %v328 = vld [vmem:[%s0 + $0x4d] sm:$0x1]
    %v329 = vld [vmem:[%s0 + $0x4e] sm:$0x1]
    %v330 = vsel %vm220, %v327, 0.0
    %331 = vadd.xlane.f32.xlu0 %v330
    %v332 = vpop.xlane.xlu0 %331
    %v333 = vmul.f32 %v332, %v230
    %v334 = vsub.f32 %v327, %v333
    %v335 = vmul.f32 %v334, %v334
    %v336 = vsel %vm220, %v335, 0.0
    %337 = vadd.xlane.f32.xlu0 %v336
    %v338 = vpop.xlane.xlu0 %337
    %v339 = vmul.f32 %v338, %v230
    %v340 = vadd.f32 %v339, 1e-05
    %v341 = vrsqrt.pop %v340
    %v342 = vmul.f32 %v341, %v340
    %v343 = vmul.f32 %v342, %v341
    %v344 = vmul.f32 0.5, %v343
    %v345 = vsub.f32 1.5, %v344
    %v346 = vmul.f32 %v341, %v345
    %vm347 = vweird.f32 %v340
    %vm348 = vweird.f32 %v341
    %vm349 = vmor %vm347, %vm348
    %v350 = vsel %vm349, %v341, %v346
    %v351 = vmul.f32 %v334, %v350
    %v352 = vperm.slane %v328, 0
    %v353 = vmul.f32 %v351, %v352
    %v354 = vperm.slane %v329, 0
    %v355 = vadd.f32 %v353, %v354
    %356 = vst.msk [vmem:[#allocation2] sm:$0x3] %vm220, %v355
    // Predicated region
    $region10: #{encoder_pallas.1} parent=1 // pred_check
      _
    $region11: #{encoder_pallas.1} parent=1 // pred_check_branch
      %358 = sbr.rel (0) target = $region13
    $region12: #{encoder_pallas.1} parent=1 // pred_region
      %360 = vsyncadd [#allocation3], 0
      %s362 = sshll.u32 [#allocation2], 4
      %s363 = int_to_ptr.vmem [resolvable:$true] %s362
      %s364 = sshll.u32 %s2, 4
      %s365 = int_to_ptr.hbm [resolvable:$true] %s364
      %367 = dma.vmem_to_hbm [thread:$0]  %s363, 32, %s365, [#allocation3]
    $region13: #{encoder_pallas.1} parent=1 // pred_fallthru
      _
    // Predicated region
    $region14: #{encoder_pallas.1} parent=1 // pred_check
      _
    $region15: #{encoder_pallas.1} parent=1 // pred_check_branch
      %369 = sbr.rel (0) target = $region17
    $region16: #{encoder_pallas.1} parent=1 // pred_region
      %371 = dma.done [#allocation3], 32
    $region17: #{encoder_pallas.1} parent=1 // pred_fallthru
      _
    %372 = vsyncpa [#allocation3], 1

</llo_original>
